<compile_context>
chip_gen: v7x
topology: tpu7x:2x2x1
jax: 0.10.0
libtpu: 0.0.40
codegen_flags: <defaults>
</compile_context>

<pallas_src>
import math

import jax
import jax.numpy as jnp
from jax.experimental import pallas as pl
from jax.experimental.pallas import tpu as pltpu


def q_network_kernel(x_ref, w1_ref, b1_ref, w2_ref, b2_ref, w3_ref, b3_ref, o_ref):
    x = x_ref[...]          # [4, TB]   batch on lanes, features on sublanes
    w1 = w1_ref[...]        # [128, 4]  (out, in)

    # Layer 1: Linear(4 -> 128) + Tanh.
    # K=4 contraction would use <3% of an MXU pass -> do 4 broadcast FMAs on the VPU.
    h1 = w1[:, 0:1] * x[0:1, :]
    for k in range(1, 4):
        h1 = h1 + w1[:, k:k + 1] * x[k:k + 1, :]
    h1 = jnp.tanh(h1 + b1_ref[...])                          # [128, TB]  (EUP tanh)

    # Layer 2: Linear(128 -> 64) + ReLU — the only contraction worth the MXU.
    h2 = jnp.dot(w2_ref[...], h1, preferred_element_type=jnp.float32)
    h2 = jnp.maximum(h2 + b2_ref[...], 0.0)                  # [64, TB]

    # Layer 3: Linear(64 -> 2) + ReLU.
    # N=2 output -> 2 weighted sublane reductions instead of an MXU pass.
    w3t = w3_ref[...]                                        # [64, 2]  (in, out)
    q0 = jnp.sum(w3t[:, 0:1] * h2, axis=0, keepdims=True)    # [1, TB]
    q1 = jnp.sum(w3t[:, 1:2] * h2, axis=0, keepdims=True)    # [1, TB]
    q = jnp.concatenate([q0, q1], axis=0) + b3_ref[...]      # [2, TB]
    o_ref[...] = jnp.maximum(q, 0.0)


def _round_up(n, m):
    return ((n + m - 1) // m) * m


def q_network_forward(x, params, *, block_b=1024):
    """x: [B, 4] float32 -> [B, 2] float32 Q-values.

    params are in PyTorch nn.Linear layout: W [out, in], b [out].
    """
    w1, b1, w2, b2, w3, b3 = params
    B = x.shape[0]

    # Batch tile: lane-dense (multiple of 128), capped at block_b.
    TB = min(_round_up(block_b, 128), _round_up(B, 128))
    Bp = pl.cdiv(B, TB) * TB
    n_blocks = Bp // TB

    # Feature-major layout: batch on the lane axis. Zero-pad the ragged tail;
    # padded columns are computed and sliced away below.
    x_t = jnp.pad(x, ((0, Bp - B), (0, 0))).T                # [4, Bp]
    b1c = b1.reshape(-1, 1)                                  # [128, 1]
    b2c = b2.reshape(-1, 1)                                  # [64, 1]
    b3c = b3.reshape(-1, 1)                                  # [2, 1]
    w3_t = w3.T                                              # [64, 2]

    const = lambda shape: pl.BlockSpec(shape, lambda i: (0, 0))  # VMEM-resident across steps

    out_t = pl.pallas_call(
        q_network_kernel,
        out_shape=jax.ShapeDtypeStruct((2, Bp), jnp.float32),
        grid=(n_blocks,),
        in_specs=[
            pl.BlockSpec((4, TB), lambda i: (0, i)),         # activation stream
            const(w1.shape), const(b1c.shape),
            const(w2.shape), const(b2c.shape),
            const(w3_t.shape), const(b3c.shape),
        ],
        out_specs=pl.BlockSpec((2, TB), lambda i: (0, i)),
        compiler_params=pltpu.CompilerParams(
            dimension_semantics=("parallel",),
        ),
    )(x_t, w1, b1c, w2, b2c, w3_t, b3c)

    return out_t[:, :B].T                                    # [B, 2]


def init_params(key):
    """PyTorch nn.Linear default init: W [out, in], b [out], U(-1/sqrt(fan_in), 1/sqrt(fan_in))."""
    dims = [(4, 128), (128, 64), (64, 2)]
    params = []
    for fan_in, fan_out in dims:
        key, kw, kb = jax.random.split(key, 3)
        bound = 1.0 / math.sqrt(fan_in)
        w = jax.random.uniform(kw, (fan_out, fan_in), jnp.float32, -bound, bound)
        b = jax.random.uniform(kb, (fan_out,), jnp.float32, -bound, bound)
        params.extend([w, b])
    return tuple(params)


def q_network_ref(x, params):
    w1, b1, w2, b2, w3, b3 = params
    h = jnp.tanh(x @ w1.T + b1)
    h = jnp.maximum(h @ w2.T + b2, 0.0)
    return jnp.maximum(h @ w3.T + b3, 0.0)


if __name__ == "__main__":
    key = jax.random.PRNGKey(0)
    kparam, kx = jax.random.split(key)
    params = init_params(kparam)

    # CartPole states are 4-dimensional; small batch of 8 states.
    B = 8
    x = jax.random.normal(kx, (B, 4), dtype=jnp.float32)
    out = jax.block_until_ready(q_network_forward(x, params))
    ref = q_network_ref(x, params)
    assert out.shape == (B, 2)
    assert jnp.allclose(out, ref, atol=1e-4, rtol=1e-5), "mismatch vs reference (B=8)"

    # Exercise the multi-step batch grid + ragged-tail padding path.
    B2 = 300
    x2 = jax.random.normal(jax.random.PRNGKey(1), (B2, 4), dtype=jnp.float32)
    out2 = jax.block_until_ready(q_network_forward(x2, params, block_b=128))
    ref2 = q_network_ref(x2, params)
    assert out2.shape == (B2, 2)
    assert jnp.allclose(out2, ref2, atol=1e-4, rtol=1e-5), "mismatch vs reference (B=300)"

    print("KERNEL_OK")
</pallas_src>

<mosaic_0001>
module attributes {stable_mosaic.version = 11 : i64} {
  func.func @q_network_kernel(%arg0: i32, %arg1: memref<4x128xf32, #tpu.memory_space<vmem>>, %arg2: memref<128x4xf32, #tpu.memory_space<vmem>>, %arg3: memref<128x1xf32, #tpu.memory_space<vmem>>, %arg4: memref<64x128xf32, #tpu.memory_space<vmem>>, %arg5: memref<64x1xf32, #tpu.memory_space<vmem>>, %arg6: memref<64x2xf32, #tpu.memory_space<vmem>>, %arg7: memref<2x1xf32, #tpu.memory_space<vmem>>, %arg8: memref<2x128xf32, #tpu.memory_space<vmem>>) attributes {dimension_semantics = [#tpu.dimension_semantics<parallel>], iteration_bounds = array<i64: 1>, scalar_prefetch = 0 : i64, scratch_operands = 0 : i64, tpu.core_type = #tpu.core_type<tc>, window_params = [{transform_indices = @transform_0, window_bounds = array<i64: 4, 128>}, {pipeline_mode = #tpu.pipeline_mode<synchronous>, transform_indices = @transform_1, window_bounds = array<i64: 128, 4>}, {pipeline_mode = #tpu.pipeline_mode<synchronous>, transform_indices = @transform_2, window_bounds = array<i64: 128, 1>}, {pipeline_mode = #tpu.pipeline_mode<synchronous>, transform_indices = @transform_3, window_bounds = array<i64: 64, 128>}, {pipeline_mode = #tpu.pipeline_mode<synchronous>, transform_indices = @transform_4, window_bounds = array<i64: 64, 1>}, {pipeline_mode = #tpu.pipeline_mode<synchronous>, transform_indices = @transform_5, window_bounds = array<i64: 64, 2>}, {pipeline_mode = #tpu.pipeline_mode<synchronous>, transform_indices = @transform_6, window_bounds = array<i64: 2, 1>}, {transform_indices = @transform_7, window_bounds = array<i64: 2, 128>}]} {
    %c0 = arith.constant 0 : index
    %c0_0 = arith.constant 0 : index
    %0 = vector.load %arg1[%c0, %c0_0] : memref<4x128xf32, #tpu.memory_space<vmem>>, vector<4x128xf32>
    %c0_1 = arith.constant 0 : index
    %c0_2 = arith.constant 0 : index
    %1 = vector.load %arg2[%c0_1, %c0_2] : memref<128x4xf32, #tpu.memory_space<vmem>>, vector<128x4xf32>
    %2 = vector.extract_strided_slice %1 {offsets = [0, 0], sizes = [128, 1], strides = [1, 1]} : vector<128x4xf32> to vector<128x1xf32>
    %3 = vector.extract_strided_slice %0 {offsets = [0, 0], sizes = [1, 128], strides = [1, 1]} : vector<4x128xf32> to vector<1x128xf32>
    %4 = vector.broadcast %2 : vector<128x1xf32> to vector<128x128xf32>
    %5 = vector.broadcast %3 : vector<1x128xf32> to vector<128x128xf32>
    %6 = arith.mulf %4, %5 : vector<128x128xf32>
    %7 = vector.extract_strided_slice %1 {offsets = [0, 1], sizes = [128, 1], strides = [1, 1]} : vector<128x4xf32> to vector<128x1xf32>
    %8 = vector.extract_strided_slice %0 {offsets = [1, 0], sizes = [1, 128], strides = [1, 1]} : vector<4x128xf32> to vector<1x128xf32>
    %9 = vector.broadcast %7 : vector<128x1xf32> to vector<128x128xf32>
    %10 = vector.broadcast %8 : vector<1x128xf32> to vector<128x128xf32>
    %11 = arith.mulf %9, %10 : vector<128x128xf32>
    %12 = arith.addf %6, %11 : vector<128x128xf32>
    %13 = vector.extract_strided_slice %1 {offsets = [0, 2], sizes = [128, 1], strides = [1, 1]} : vector<128x4xf32> to vector<128x1xf32>
    %14 = vector.extract_strided_slice %0 {offsets = [2, 0], sizes = [1, 128], strides = [1, 1]} : vector<4x128xf32> to vector<1x128xf32>
    %15 = vector.broadcast %13 : vector<128x1xf32> to vector<128x128xf32>
    %16 = vector.broadcast %14 : vector<1x128xf32> to vector<128x128xf32>
    %17 = arith.mulf %15, %16 : vector<128x128xf32>
    %18 = arith.addf %12, %17 : vector<128x128xf32>
    %19 = vector.extract_strided_slice %1 {offsets = [0, 3], sizes = [128, 1], strides = [1, 1]} : vector<128x4xf32> to vector<128x1xf32>
    %20 = vector.extract_strided_slice %0 {offsets = [3, 0], sizes = [1, 128], strides = [1, 1]} : vector<4x128xf32> to vector<1x128xf32>
    %21 = vector.broadcast %19 : vector<128x1xf32> to vector<128x128xf32>
    %22 = vector.broadcast %20 : vector<1x128xf32> to vector<128x128xf32>
    %23 = arith.mulf %21, %22 : vector<128x128xf32>
    %24 = arith.addf %18, %23 : vector<128x128xf32>
    %c0_3 = arith.constant 0 : index
    %c0_4 = arith.constant 0 : index
    %25 = vector.load %arg3[%c0_3, %c0_4] : memref<128x1xf32, #tpu.memory_space<vmem>>, vector<128x1xf32>
    %26 = vector.broadcast %25 : vector<128x1xf32> to vector<128x128xf32>
    %27 = arith.addf %24, %26 : vector<128x128xf32>
    %28 = math.tanh %27 : vector<128x128xf32>
    %c0_5 = arith.constant 0 : index
    %c0_6 = arith.constant 0 : index
    %29 = vector.load %arg4[%c0_5, %c0_6] : memref<64x128xf32, #tpu.memory_space<vmem>>, vector<64x128xf32>
    %cst = arith.constant dense<0.000000e+00> : vector<64x128xf32>
    %30 = tpu.matmul %29, %28, %cst {dimension_numbers = #tpu.dot_dimension_numbers<[1], [0], [0], [1], [0, 0, 1, 1], [], []>} : vector<64x128xf32>, vector<128x128xf32>, vector<64x128xf32> -> vector<64x128xf32>
    %c0_7 = arith.constant 0 : index
    %c0_8 = arith.constant 0 : index
    %31 = vector.load %arg5[%c0_7, %c0_8] : memref<64x1xf32, #tpu.memory_space<vmem>>, vector<64x1xf32>
    %32 = vector.broadcast %31 : vector<64x1xf32> to vector<64x128xf32>
    %33 = arith.addf %30, %32 : vector<64x128xf32>
    %cst_9 = arith.constant 0.000000e+00 : f32
    %34 = vector.broadcast %cst_9 : f32 to vector<64x128xf32>
    %35 = arith.maximumf %33, %34 : vector<64x128xf32>
    %c0_10 = arith.constant 0 : index
    %c0_11 = arith.constant 0 : index
    %36 = vector.load %arg6[%c0_10, %c0_11] : memref<64x2xf32, #tpu.memory_space<vmem>>, vector<64x2xf32>
    %37 = vector.extract_strided_slice %36 {offsets = [0, 0], sizes = [64, 1], strides = [1, 1]} : vector<64x2xf32> to vector<64x1xf32>
    %38 = vector.broadcast %37 : vector<64x1xf32> to vector<64x128xf32>
    %39 = arith.mulf %38, %35 : vector<64x128xf32>
    %cst_12 = arith.constant dense<0.000000e+00> : vector<128xf32>
    %40 = vector.multi_reduction <add>, %39, %cst_12 [0] : vector<64x128xf32> to vector<128xf32>
    %41 = vector.shape_cast %40 : vector<128xf32> to vector<1x128xf32>
    %42 = vector.extract_strided_slice %36 {offsets = [0, 1], sizes = [64, 1], strides = [1, 1]} : vector<64x2xf32> to vector<64x1xf32>
    %43 = vector.broadcast %42 : vector<64x1xf32> to vector<64x128xf32>
    %44 = arith.mulf %43, %35 : vector<64x128xf32>
    %cst_13 = arith.constant dense<0.000000e+00> : vector<128xf32>
    %45 = vector.multi_reduction <add>, %44, %cst_13 [0] : vector<64x128xf32> to vector<128xf32>
    %46 = vector.shape_cast %45 : vector<128xf32> to vector<1x128xf32>
    %47 = tpu.concatenate %41, %46 in 0 : vector<1x128xf32>, vector<1x128xf32> -> vector<2x128xf32>
    %c0_14 = arith.constant 0 : index
    %c0_15 = arith.constant 0 : index
    %48 = vector.load %arg7[%c0_14, %c0_15] : memref<2x1xf32, #tpu.memory_space<vmem>>, vector<2x1xf32>
    %49 = vector.broadcast %48 : vector<2x1xf32> to vector<2x128xf32>
    %50 = arith.addf %47, %49 : vector<2x128xf32>
    %cst_16 = arith.constant 0.000000e+00 : f32
    %51 = vector.broadcast %cst_16 : f32 to vector<2x128xf32>
    %52 = arith.maximumf %50, %51 : vector<2x128xf32>
    %c0_17 = arith.constant 0 : index
    %c0_18 = arith.constant 0 : index
    %53 = vector.load %arg8[%c0_17, %c0_18] : memref<2x128xf32, #tpu.memory_space<vmem>>, vector<2x128xf32>
    tpu.vector_store %arg8[%c0_17, %c0_18], %52 {strides = array<i32>} : memref<2x128xf32, #tpu.memory_space<vmem>>, vector<2x128xf32>,
    return
  }
  func.func @transform_0(%arg0: i32) -> (i32, i32) {
    %c0_i32 = arith.constant 0 : i32
    %c0_i32_0 = arith.constant 0 : i32
    return %c0_i32, %arg0 : i32, i32
  }
  func.func @transform_1(%arg0: i32) -> (i32, i32) {
    %c0_i32 = arith.constant 0 : i32
    %c0_i32_0 = arith.constant 0 : i32
    %c0_i32_1 = arith.constant 0 : i32
    return %c0_i32, %c0_i32_0 : i32, i32
  }
  func.func @transform_2(%arg0: i32) -> (i32, i32) {
    %c0_i32 = arith.constant 0 : i32
    %c0_i32_0 = arith.constant 0 : i32
    %c0_i32_1 = arith.constant 0 : i32
    return %c0_i32, %c0_i32_0 : i32, i32
  }
  func.func @transform_3(%arg0: i32) -> (i32, i32) {
    %c0_i32 = arith.constant 0 : i32
    %c0_i32_0 = arith.constant 0 : i32
    %c0_i32_1 = arith.constant 0 : i32
    return %c0_i32, %c0_i32_0 : i32, i32
  }
  func.func @transform_4(%arg0: i32) -> (i32, i32) {
    %c0_i32 = arith.constant 0 : i32
    %c0_i32_0 = arith.constant 0 : i32
    %c0_i32_1 = arith.constant 0 : i32
    return %c0_i32, %c0_i32_0 : i32, i32
  }
  func.func @transform_5(%arg0: i32) -> (i32, i32) {
    %c0_i32 = arith.constant 0 : i32
    %c0_i32_0 = arith.constant 0 : i32
    %c0_i32_1 = arith.constant 0 : i32
    return %c0_i32, %c0_i32_0 : i32, i32
  }
  func.func @transform_6(%arg0: i32) -> (i32, i32) {
    %c0_i32 = arith.constant 0 : i32
    %c0_i32_0 = arith.constant 0 : i32
    %c0_i32_1 = arith.constant 0 : i32
    return %c0_i32, %c0_i32_0 : i32, i32
  }
  func.func @transform_7(%arg0: i32) -> (i32, i32) {
    %c0_i32 = arith.constant 0 : i32
    %c0_i32_0 = arith.constant 0 : i32
    return %c0_i32, %arg0 : i32, i32
  }
}

</mosaic_0001>

<llo_original>
// kernel: tpu_custom_call.1
$region0: #{tpu_custom_call.1}
  #allocation0 [shape = 'u32[]', space=smem, size = 0x4, offset = 0x4, fixed_abs, tag = 'smem constant byte address 0x4 - core index']
  #allocation1 [shape = 'u32[144,128]{1,0:T(1,128)}', space=vmem, size = 0x12000, scoped, tag = 'internal scratch']
  %s0 = inlined_call_operand.vmem [shape: f32[4,128], index: 0, kind: input, shape index: {}]
  %s1 = inlined_call_operand.vmem [shape: f32[128,4], index: 1, kind: input, shape index: {}]
  %s2 = inlined_call_operand.vmem [shape: f32[128,1], index: 2, kind: input, shape index: {}]
  %s3 = inlined_call_operand.vmem [shape: f32[64,128], index: 3, kind: input, shape index: {}]
  %s4 = inlined_call_operand.vmem [shape: f32[64,1], index: 4, kind: input, shape index: {}]
  %s5 = inlined_call_operand.vmem [shape: f32[64,2], index: 5, kind: input, shape index: {}]
  %s6 = inlined_call_operand.vmem [shape: f32[2,1], index: 6, kind: input, shape index: {}]
  %s7 = inlined_call_operand.hbm [shape: f32[2,128], index: 7, kind: output, shape index: {}]
  %s8 = sld [smem:[#allocation0]]
  $region38: #{tpu_custom_call.1} parent=0
    _
  %s10 = ssub.s32 1, %s8
  %s11 = scalar_select 0, %s10, %s8
  $region1: #{tpu_custom_call.1} parent=0
    #allocation2 [shape = 'u8[1024]{0}', space=vmem, size = 0x400, scoped, tag = 'output window, operand 0, single buffered']
    #allocation3 [shape = 's32[1]{0}', space=sflag, size = 0x4, scoped, tag = 'scoped memory for tpu_custom_call.1']
    %12 = vsyncpa [#allocation3], 0
    // Predicated region
    $region2: #{tpu_custom_call.1} parent=1 // pred_check
      _
    $region3: #{tpu_custom_call.1} parent=1 // pred_check_branch
      %14 = sbr.rel (0) target = $region5
    $region4: #{tpu_custom_call.1} parent=1 // pred_region
      _
    $region5: #{tpu_custom_call.1} parent=1 // pred_fallthru
      _
    // Predicated region
    $region6: #{tpu_custom_call.1} parent=1 // pred_check
      _
    $region7: #{tpu_custom_call.1} parent=1 // pred_check_branch
      %16 = sbr.rel (0) target = $region9
    $region8: #{tpu_custom_call.1} parent=1 // pred_region
      _
    $region9: #{tpu_custom_call.1} parent=1 // pred_fallthru
      _
    // Predicated region
    $region10: #{tpu_custom_call.1} parent=1 // pred_check
      _
    $region11: #{tpu_custom_call.1} parent=1 // pred_check_branch
      %18 = sbr.rel (0) target = $region13
    $region12: #{tpu_custom_call.1} parent=1 // pred_region
      _
    $region13: #{tpu_custom_call.1} parent=1 // pred_fallthru
      _
    // Predicated region
    $region14: #{tpu_custom_call.1} parent=1 // pred_check
      _
    $region15: #{tpu_custom_call.1} parent=1 // pred_check_branch
      %20 = sbr.rel (0) target = $region17
    $region16: #{tpu_custom_call.1} parent=1 // pred_region
      _
    $region17: #{tpu_custom_call.1} parent=1 // pred_fallthru
      _
    // Predicated region
    $region18: #{tpu_custom_call.1} parent=1 // pred_check
      _
    $region19: #{tpu_custom_call.1} parent=1 // pred_check_branch
      %22 = sbr.rel (0) target = $region21
    $region20: #{tpu_custom_call.1} parent=1 // pred_region
      _
    $region21: #{tpu_custom_call.1} parent=1 // pred_fallthru
      _
    // Predicated region
    $region22: #{tpu_custom_call.1} parent=1 // pred_check
      _
    $region23: #{tpu_custom_call.1} parent=1 // pred_check_branch
      %24 = sbr.rel (0) target = $region25
    $region24: #{tpu_custom_call.1} parent=1 // pred_region
      _
    $region25: #{tpu_custom_call.1} parent=1 // pred_fallthru
      _
    // Predicated region
    $region26: #{tpu_custom_call.1} parent=1 // pred_check
      _
    $region27: #{tpu_custom_call.1} parent=1 // pred_check_branch
      %26 = sbr.rel (0) target = $region29
    $region28: #{tpu_custom_call.1} parent=1 // pred_region
      _
    $region29: #{tpu_custom_call.1} parent=1 // pred_fallthru
      _
    %v27 = vld [vmem:[%s0] sm:$0xf]
    %v28 = vld [vmem:[%s1] sm:$0xff]
    %v29 = vld [vmem:[%s1 + $0x8] sm:$0xff]
    %v30 = vld [vmem:[%s1 + $0x10] sm:$0xff]
    %v31 = vld [vmem:[%s1 + $0x18] sm:$0xff]
    %v32 = vld [vmem:[%s1 + $0x20] sm:$0xff]
    %v33 = vld [vmem:[%s1 + $0x28] sm:$0xff]
    %v34 = vld [vmem:[%s1 + $0x30] sm:$0xff]
    %v35 = vld [vmem:[%s1 + $0x38] sm:$0xff]
    %v36 = vld [vmem:[%s1 + $0x40] sm:$0xff]
    %v37 = vld [vmem:[%s1 + $0x48] sm:$0xff]
    %v38 = vld [vmem:[%s1 + $0x50] sm:$0xff]
    %v39 = vld [vmem:[%s1 + $0x58] sm:$0xff]
    %v40 = vld [vmem:[%s1 + $0x60] sm:$0xff]
    %v41 = vld [vmem:[%s1 + $0x68] sm:$0xff]
    %v42 = vld [vmem:[%s1 + $0x70] sm:$0xff]
    %v43 = vld [vmem:[%s1 + $0x78] sm:$0xff]
    %45 = vset.pattern.permute.xlu0 0
    %46 = vperm.xlu0 %45, %v28
    %v47 = vpop.permute.xlu0 %46
    %50 = vset.pattern.permute.xlu0 0
    %51 = vperm.xlu0 %50, %v29
    %v52 = vpop.permute.xlu0 %51
    %55 = vset.pattern.permute.xlu0 0
    %56 = vperm.xlu0 %55, %v30
    %v57 = vpop.permute.xlu0 %56
    %60 = vset.pattern.permute.xlu0 0
    %61 = vperm.xlu0 %60, %v31
    %v62 = vpop.permute.xlu0 %61
    %65 = vset.pattern.permute.xlu0 0
    %66 = vperm.xlu0 %65, %v32
    %v67 = vpop.permute.xlu0 %66
    %70 = vset.pattern.permute.xlu0 0
    %71 = vperm.xlu0 %70, %v33
    %v72 = vpop.permute.xlu0 %71
    %75 = vset.pattern.permute.xlu0 0
    %76 = vperm.xlu0 %75, %v34
    %v77 = vpop.permute.xlu0 %76
    %80 = vset.pattern.permute.xlu0 0
    %81 = vperm.xlu0 %80, %v35
    %v82 = vpop.permute.xlu0 %81
    %85 = vset.pattern.permute.xlu0 0
    %86 = vperm.xlu0 %85, %v36
    %v87 = vpop.permute.xlu0 %86
    %90 = vset.pattern.permute.xlu0 0
    %91 = vperm.xlu0 %90, %v37
    %v92 = vpop.permute.xlu0 %91
    %95 = vset.pattern.permute.xlu0 0
    %96 = vperm.xlu0 %95, %v38
    %v97 = vpop.permute.xlu0 %96
    %100 = vset.pattern.permute.xlu0 0
    %101 = vperm.xlu0 %100, %v39
    %v102 = vpop.permute.xlu0 %101
    %105 = vset.pattern.permute.xlu0 0
    %106 = vperm.xlu0 %105, %v40
    %v107 = vpop.permute.xlu0 %106
    %110 = vset.pattern.permute.xlu0 0
    %111 = vperm.xlu0 %110, %v41
    %v112 = vpop.permute.xlu0 %111
    %115 = vset.pattern.permute.xlu0 0
    %116 = vperm.xlu0 %115, %v42
    %v117 = vpop.permute.xlu0 %116
    %120 = vset.pattern.permute.xlu0 0
    %121 = vperm.xlu0 %120, %v43
    %v122 = vpop.permute.xlu0 %121
    %v124 = vlaneseq
    %v125 = vshrl.u32 %v124, 7
    %v126 = vsub.s32 0, %v125
    %v127 = vrot.slane %v27, %v126
    %v128 = vmul.f32 %v47, %v127
    %v129 = vmul.f32 %v52, %v127
    %v130 = vmul.f32 %v57, %v127
    %v131 = vmul.f32 %v62, %v127
    %v132 = vmul.f32 %v67, %v127
    %v133 = vmul.f32 %v72, %v127
    %v134 = vmul.f32 %v77, %v127
    %v135 = vmul.f32 %v82, %v127
    %v136 = vmul.f32 %v87, %v127
    %v137 = vmul.f32 %v92, %v127
    %v138 = vmul.f32 %v97, %v127
    %v139 = vmul.f32 %v102, %v127
    %v140 = vmul.f32 %v107, %v127
    %v141 = vmul.f32 %v112, %v127
    %v142 = vmul.f32 %v117, %v127
    %v143 = vmul.f32 %v122, %v127
    %144 = vset.pattern.permute.xlu0 1
    %145 = vperm.xlu0 %144, %v28
    %v146 = vpop.permute.xlu0 %145
    %148 = vset.pattern.permute.xlu0 1
    %149 = vperm.xlu0 %148, %v29
    %v150 = vpop.permute.xlu0 %149
    %152 = vset.pattern.permute.xlu0 1
    %153 = vperm.xlu0 %152, %v30
    %v154 = vpop.permute.xlu0 %153
    %156 = vset.pattern.permute.xlu0 1
    %157 = vperm.xlu0 %156, %v31
    %v158 = vpop.permute.xlu0 %157
    %160 = vset.pattern.permute.xlu0 1
    %161 = vperm.xlu0 %160, %v32
    %v162 = vpop.permute.xlu0 %161
    %164 = vset.pattern.permute.xlu0 1
    %165 = vperm.xlu0 %164, %v33
    %v166 = vpop.permute.xlu0 %165
    %168 = vset.pattern.permute.xlu0 1
    %169 = vperm.xlu0 %168, %v34
    %v170 = vpop.permute.xlu0 %169
    %172 = vset.pattern.permute.xlu0 1
    %173 = vperm.xlu0 %172, %v35
    %v174 = vpop.permute.xlu0 %173
    %176 = vset.pattern.permute.xlu0 1
    %177 = vperm.xlu0 %176, %v36
    %v178 = vpop.permute.xlu0 %177
    %180 = vset.pattern.permute.xlu0 1
    %181 = vperm.xlu0 %180, %v37
    %v182 = vpop.permute.xlu0 %181
    %184 = vset.pattern.permute.xlu0 1
    %185 = vperm.xlu0 %184, %v38
    %v186 = vpop.permute.xlu0 %185
    %188 = vset.pattern.permute.xlu0 1
    %189 = vperm.xlu0 %188, %v39
    %v190 = vpop.permute.xlu0 %189
    %192 = vset.pattern.permute.xlu0 1
    %193 = vperm.xlu0 %192, %v40
    %v194 = vpop.permute.xlu0 %193
    %196 = vset.pattern.permute.xlu0 1
    %197 = vperm.xlu0 %196, %v41
    %v198 = vpop.permute.xlu0 %197
    %200 = vset.pattern.permute.xlu0 1
    %201 = vperm.xlu0 %200, %v42
    %v202 = vpop.permute.xlu0 %201
    %204 = vset.pattern.permute.xlu0 1
    %205 = vperm.xlu0 %204, %v43
    %v206 = vpop.permute.xlu0 %205
    %v208 = vlaneseq
    %v209 = vshrl.u32 %v208, 7
    %v210 = vsub.s32 1, %v209
    %v211 = vrot.slane %v27, %v210
    %v212 = vmul.f32 %v146, %v211
    %v213 = vmul.f32 %v150, %v211
    %v214 = vmul.f32 %v154, %v211
    %v215 = vmul.f32 %v158, %v211
    %v216 = vmul.f32 %v162, %v211
    %v217 = vmul.f32 %v166, %v211
    %v218 = vmul.f32 %v170, %v211
    %v219 = vmul.f32 %v174, %v211
    %v220 = vmul.f32 %v178, %v211
    %v221 = vmul.f32 %v182, %v211
    %v222 = vmul.f32 %v186, %v211
    %v223 = vmul.f32 %v190, %v211
    %v224 = vmul.f32 %v194, %v211
    %v225 = vmul.f32 %v198, %v211
    %v226 = vmul.f32 %v202, %v211
    %v227 = vmul.f32 %v206, %v211
    %v228 = vadd.f32 %v128, %v212
    %v229 = vadd.f32 %v129, %v213
    %v230 = vadd.f32 %v130, %v214
    %v231 = vadd.f32 %v131, %v215
    %v232 = vadd.f32 %v132, %v216
    %v233 = vadd.f32 %v133, %v217
    %v234 = vadd.f32 %v134, %v218
    %v235 = vadd.f32 %v135, %v219
    %v236 = vadd.f32 %v136, %v220
    %v237 = vadd.f32 %v137, %v221
    %v238 = vadd.f32 %v138, %v222
    %v239 = vadd.f32 %v139, %v223
    %v240 = vadd.f32 %v140, %v224
    %v241 = vadd.f32 %v141, %v225
    %v242 = vadd.f32 %v142, %v226
    %v243 = vadd.f32 %v143, %v227
    %244 = vset.pattern.permute.xlu0 2
    %245 = vperm.xlu0 %244, %v28
    %v246 = vpop.permute.xlu0 %245
    %248 = vset.pattern.permute.xlu0 2
    %249 = vperm.xlu0 %248, %v29
    %v250 = vpop.permute.xlu0 %249
    %252 = vset.pattern.permute.xlu0 2
    %253 = vperm.xlu0 %252, %v30
    %v254 = vpop.permute.xlu0 %253
    %256 = vset.pattern.permute.xlu0 2
    %257 = vperm.xlu0 %256, %v31
    %v258 = vpop.permute.xlu0 %257
    %260 = vset.pattern.permute.xlu0 2
    %261 = vperm.xlu0 %260, %v32
    %v262 = vpop.permute.xlu0 %261
    %264 = vset.pattern.permute.xlu0 2
    %265 = vperm.xlu0 %264, %v33
    %v266 = vpop.permute.xlu0 %265
    %268 = vset.pattern.permute.xlu0 2
    %269 = vperm.xlu0 %268, %v34
    %v270 = vpop.permute.xlu0 %269
    %272 = vset.pattern.permute.xlu0 2
    %273 = vperm.xlu0 %272, %v35
    %v274 = vpop.permute.xlu0 %273
    %276 = vset.pattern.permute.xlu0 2
    %277 = vperm.xlu0 %276, %v36
    %v278 = vpop.permute.xlu0 %277
    %280 = vset.pattern.permute.xlu0 2
    %281 = vperm.xlu0 %280, %v37
    %v282 = vpop.permute.xlu0 %281
    %284 = vset.pattern.permute.xlu0 2
    %285 = vperm.xlu0 %284, %v38
    %v286 = vpop.permute.xlu0 %285
    %288 = vset.pattern.permute.xlu0 2
    %289 = vperm.xlu0 %288, %v39
    %v290 = vpop.permute.xlu0 %289
    %292 = vset.pattern.permute.xlu0 2
    %293 = vperm.xlu0 %292, %v40
    %v294 = vpop.permute.xlu0 %293
    %296 = vset.pattern.permute.xlu0 2
    %297 = vperm.xlu0 %296, %v41
    %v298 = vpop.permute.xlu0 %297
    %300 = vset.pattern.permute.xlu0 2
    %301 = vperm.xlu0 %300, %v42
    %v302 = vpop.permute.xlu0 %301
    %304 = vset.pattern.permute.xlu0 2
    %305 = vperm.xlu0 %304, %v43
    %v306 = vpop.permute.xlu0 %305
    %v308 = vlaneseq
    %v309 = vshrl.u32 %v308, 7
    %v310 = vsub.s32 2, %v309
    %v311 = vrot.slane %v27, %v310
    %v312 = vmul.f32 %v246, %v311
    %v313 = vmul.f32 %v250, %v311
    %v314 = vmul.f32 %v254, %v311
    %v315 = vmul.f32 %v258, %v311
    %v316 = vmul.f32 %v262, %v311
    %v317 = vmul.f32 %v266, %v311
    %v318 = vmul.f32 %v270, %v311
    %v319 = vmul.f32 %v274, %v311
    %v320 = vmul.f32 %v278, %v311
    %v321 = vmul.f32 %v282, %v311
    %v322 = vmul.f32 %v286, %v311
    %v323 = vmul.f32 %v290, %v311
    %v324 = vmul.f32 %v294, %v311
    %v325 = vmul.f32 %v298, %v311
    %v326 = vmul.f32 %v302, %v311
    %v327 = vmul.f32 %v306, %v311
    %v328 = vadd.f32 %v228, %v312
    %v329 = vadd.f32 %v229, %v313
    %v330 = vadd.f32 %v230, %v314
    %v331 = vadd.f32 %v231, %v315
    %v332 = vadd.f32 %v232, %v316
    %v333 = vadd.f32 %v233, %v317
    %v334 = vadd.f32 %v234, %v318
    %v335 = vadd.f32 %v235, %v319
    %v336 = vadd.f32 %v236, %v320
    %v337 = vadd.f32 %v237, %v321
    %v338 = vadd.f32 %v238, %v322
    %v339 = vadd.f32 %v239, %v323
    %v340 = vadd.f32 %v240, %v324
    %v341 = vadd.f32 %v241, %v325
    %v342 = vadd.f32 %v242, %v326
    %v343 = vadd.f32 %v243, %v327
    %344 = vset.pattern.permute.xlu0 3
    %345 = vperm.xlu0 %344, %v28
    %v346 = vpop.permute.xlu0 %345
    %348 = vset.pattern.permute.xlu0 3
    %349 = vperm.xlu0 %348, %v29
    %v350 = vpop.permute.xlu0 %349
    %352 = vset.pattern.permute.xlu0 3
    %353 = vperm.xlu0 %352, %v30
    %v354 = vpop.permute.xlu0 %353
    %356 = vset.pattern.permute.xlu0 3
    %357 = vperm.xlu0 %356, %v31
    %v358 = vpop.permute.xlu0 %357
    %360 = vset.pattern.permute.xlu0 3
    %361 = vperm.xlu0 %360, %v32
    %v362 = vpop.permute.xlu0 %361
    %364 = vset.pattern.permute.xlu0 3
    %365 = vperm.xlu0 %364, %v33
    %v366 = vpop.permute.xlu0 %365
    %368 = vset.pattern.permute.xlu0 3
    %369 = vperm.xlu0 %368, %v34
    %v370 = vpop.permute.xlu0 %369
    %372 = vset.pattern.permute.xlu0 3
    %373 = vperm.xlu0 %372, %v35
    %v374 = vpop.permute.xlu0 %373
    %376 = vset.pattern.permute.xlu0 3
    %377 = vperm.xlu0 %376, %v36
    %v378 = vpop.permute.xlu0 %377
    %380 = vset.pattern.permute.xlu0 3
    %381 = vperm.xlu0 %380, %v37
    %v382 = vpop.permute.xlu0 %381
    %384 = vset.pattern.permute.xlu0 3
    %385 = vperm.xlu0 %384, %v38
    %v386 = vpop.permute.xlu0 %385
    %388 = vset.pattern.permute.xlu0 3
    %389 = vperm.xlu0 %388, %v39
    %v390 = vpop.permute.xlu0 %389
    %392 = vset.pattern.permute.xlu0 3
    %393 = vperm.xlu0 %392, %v40
    %v394 = vpop.permute.xlu0 %393
    %396 = vset.pattern.permute.xlu0 3
    %397 = vperm.xlu0 %396, %v41
    %v398 = vpop.permute.xlu0 %397
    %400 = vset.pattern.permute.xlu0 3
    %401 = vperm.xlu0 %400, %v42
    %v402 = vpop.permute.xlu0 %401
    %404 = vset.pattern.permute.xlu0 3
    %405 = vperm.xlu0 %404, %v43
    %v406 = vpop.permute.xlu0 %405
    %v408 = vlaneseq
    %v409 = vshrl.u32 %v408, 7
    %v410 = vsub.s32 3, %v409
    %v411 = vrot.slane %v27, %v410
    %v412 = vmul.f32 %v346, %v411
    %v413 = vmul.f32 %v350, %v411
    %v414 = vmul.f32 %v354, %v411
    %v415 = vmul.f32 %v358, %v411
    %v416 = vmul.f32 %v362, %v411
    %v417 = vmul.f32 %v366, %v411
    %v418 = vmul.f32 %v370, %v411
    %v419 = vmul.f32 %v374, %v411
    %v420 = vmul.f32 %v378, %v411
    %v421 = vmul.f32 %v382, %v411
    %v422 = vmul.f32 %v386, %v411
    %v423 = vmul.f32 %v390, %v411
    %v424 = vmul.f32 %v394, %v411
    %v425 = vmul.f32 %v398, %v411
    %v426 = vmul.f32 %v402, %v411
    %v427 = vmul.f32 %v406, %v411
    %v428 = vadd.f32 %v328, %v412
    %v429 = vadd.f32 %v329, %v413
    %v430 = vadd.f32 %v330, %v414
    %v431 = vadd.f32 %v331, %v415
    %v432 = vadd.f32 %v332, %v416
    %v433 = vadd.f32 %v333, %v417
    %v434 = vadd.f32 %v334, %v418
    %v435 = vadd.f32 %v335, %v419
    %v436 = vadd.f32 %v336, %v420
    %v437 = vadd.f32 %v337, %v421
    %v438 = vadd.f32 %v338, %v422
    %v439 = vadd.f32 %v339, %v423
    %v440 = vadd.f32 %v340, %v424
    %v441 = vadd.f32 %v341, %v425
    %v442 = vadd.f32 %v342, %v426
    %v443 = vadd.f32 %v343, %v427
    %v444 = vld [vmem:[%s2] sm:$0xff]
    %v445 = vld [vmem:[%s2 + $0x8] sm:$0xff]
    %v446 = vld [vmem:[%s2 + $0x10] sm:$0xff]
    %v447 = vld [vmem:[%s2 + $0x18] sm:$0xff]
    %v448 = vld [vmem:[%s2 + $0x20] sm:$0xff]
    %v449 = vld [vmem:[%s2 + $0x28] sm:$0xff]
    %v450 = vld [vmem:[%s2 + $0x30] sm:$0xff]
    %v451 = vld [vmem:[%s2 + $0x38] sm:$0xff]
    %v452 = vld [vmem:[%s2 + $0x40] sm:$0xff]
    %v453 = vld [vmem:[%s2 + $0x48] sm:$0xff]
    %v454 = vld [vmem:[%s2 + $0x50] sm:$0xff]
    %v455 = vld [vmem:[%s2 + $0x58] sm:$0xff]
    %v456 = vld [vmem:[%s2 + $0x60] sm:$0xff]
    %v457 = vld [vmem:[%s2 + $0x68] sm:$0xff]
    %v458 = vld [vmem:[%s2 + $0x70] sm:$0xff]
    %v459 = vld [vmem:[%s2 + $0x78] sm:$0xff]
    %461 = vset.pattern.permute.xlu0 0
    %462 = vperm.xlu0 %461, %v444
    %v463 = vpop.permute.xlu0 %462
    %466 = vset.pattern.permute.xlu0 0
    %467 = vperm.xlu0 %466, %v445
    %v468 = vpop.permute.xlu0 %467
    %471 = vset.pattern.permute.xlu0 0
    %472 = vperm.xlu0 %471, %v446
    %v473 = vpop.permute.xlu0 %472
    %476 = vset.pattern.permute.xlu0 0
    %477 = vperm.xlu0 %476, %v447
    %v478 = vpop.permute.xlu0 %477
    %481 = vset.pattern.permute.xlu0 0
    %482 = vperm.xlu0 %481, %v448
    %v483 = vpop.permute.xlu0 %482
    %486 = vset.pattern.permute.xlu0 0
    %487 = vperm.xlu0 %486, %v449
    %v488 = vpop.permute.xlu0 %487
    %491 = vset.pattern.permute.xlu0 0
    %492 = vperm.xlu0 %491, %v450
    %v493 = vpop.permute.xlu0 %492
    %496 = vset.pattern.permute.xlu0 0
    %497 = vperm.xlu0 %496, %v451
    %v498 = vpop.permute.xlu0 %497
    %501 = vset.pattern.permute.xlu0 0
    %502 = vperm.xlu0 %501, %v452
    %v503 = vpop.permute.xlu0 %502
    %506 = vset.pattern.permute.xlu0 0
    %507 = vperm.xlu0 %506, %v453
    %v508 = vpop.permute.xlu0 %507
    %511 = vset.pattern.permute.xlu0 0
    %512 = vperm.xlu0 %511, %v454
    %v513 = vpop.permute.xlu0 %512
    %516 = vset.pattern.permute.xlu0 0
    %517 = vperm.xlu0 %516, %v455
    %v518 = vpop.permute.xlu0 %517
    %521 = vset.pattern.permute.xlu0 0
    %522 = vperm.xlu0 %521, %v456
    %v523 = vpop.permute.xlu0 %522
    %526 = vset.pattern.permute.xlu0 0
    %527 = vperm.xlu0 %526, %v457
    %v528 = vpop.permute.xlu0 %527
    %531 = vset.pattern.permute.xlu0 0
    %532 = vperm.xlu0 %531, %v458
    %v533 = vpop.permute.xlu0 %532
    %536 = vset.pattern.permute.xlu0 0
    %537 = vperm.xlu0 %536, %v459
    %v538 = vpop.permute.xlu0 %537
    %v540 = vadd.f32 %v428, %v463
    %v541 = vadd.f32 %v429, %v468
    %v542 = vadd.f32 %v430, %v473
    %v543 = vadd.f32 %v431, %v478
    %v544 = vadd.f32 %v432, %v483
    %v545 = vadd.f32 %v433, %v488
    %v546 = vadd.f32 %v434, %v493
    %v547 = vadd.f32 %v435, %v498
    %v548 = vadd.f32 %v436, %v503
    %v549 = vadd.f32 %v437, %v508
    %v550 = vadd.f32 %v438, %v513
    %v551 = vadd.f32 %v439, %v518
    %v552 = vadd.f32 %v440, %v523
    %v553 = vadd.f32 %v441, %v528
    %v554 = vadd.f32 %v442, %v533
    %v555 = vadd.f32 %v443, %v538
    %v556 = vtanh.pop %v540
    %v557 = vtanh.pop %v541
    %v558 = vtanh.pop %v542
    %v559 = vtanh.pop %v543
    %v560 = vtanh.pop %v544
    %v561 = vtanh.pop %v545
    %v562 = vtanh.pop %v546
    %v563 = vtanh.pop %v547
    %v564 = vtanh.pop %v548
    %v565 = vtanh.pop %v549
    %v566 = vtanh.pop %v550
    %v567 = vtanh.pop %v551
    %v568 = vtanh.pop %v552
    %v569 = vtanh.pop %v553
    %v570 = vtanh.pop %v554
    %v571 = vtanh.pop %v555
    %v572 = vld [vmem:[%s3] sm:$0xff]
    %v573 = vld [vmem:[%s3 + $0x8] sm:$0xff]
    %v574 = vld [vmem:[%s3 + $0x10] sm:$0xff]
    %v575 = vld [vmem:[%s3 + $0x18] sm:$0xff]
    %v576 = vld [vmem:[%s3 + $0x20] sm:$0xff]
    %v577 = vld [vmem:[%s3 + $0x28] sm:$0xff]
    %v578 = vld [vmem:[%s3 + $0x30] sm:$0xff]
    %v579 = vld [vmem:[%s3 + $0x38] sm:$0xff]
    %v580 = vld [vmem:[%s4] sm:$0xff]
    %v581 = vld [vmem:[%s4 + $0x8] sm:$0xff]
    %v582 = vld [vmem:[%s4 + $0x10] sm:$0xff]
    %v583 = vld [vmem:[%s4 + $0x18] sm:$0xff]
    %v584 = vld [vmem:[%s4 + $0x20] sm:$0xff]
    %v585 = vld [vmem:[%s4 + $0x28] sm:$0xff]
    %v586 = vld [vmem:[%s4 + $0x30] sm:$0xff]
    %v587 = vld [vmem:[%s4 + $0x38] sm:$0xff]
    %589 = vset.pattern.permute.xlu0 0
    %590 = vperm.xlu0 %589, %v580
    %v591 = vpop.permute.xlu0 %590
    %594 = vset.pattern.permute.xlu0 0
    %595 = vperm.xlu0 %594, %v581
    %v596 = vpop.permute.xlu0 %595
    %599 = vset.pattern.permute.xlu0 0
    %600 = vperm.xlu0 %599, %v582
    %v601 = vpop.permute.xlu0 %600
    %604 = vset.pattern.permute.xlu0 0
    %605 = vperm.xlu0 %604, %v583
    %v606 = vpop.permute.xlu0 %605
    %609 = vset.pattern.permute.xlu0 0
    %610 = vperm.xlu0 %609, %v584
    %v611 = vpop.permute.xlu0 %610
    %614 = vset.pattern.permute.xlu0 0
    %615 = vperm.xlu0 %614, %v585
    %v616 = vpop.permute.xlu0 %615
    %619 = vset.pattern.permute.xlu0 0
    %620 = vperm.xlu0 %619, %v586
    %v621 = vpop.permute.xlu0 %620
    %624 = vset.pattern.permute.xlu0 0
    %625 = vperm.xlu0 %624, %v587
    %v626 = vpop.permute.xlu0 %625
    %628 = vmatprep.subr.mxu0 0.0
    %629 = vmatpush1.msra.mxu0 %v556
    %630 = vmatprep.subr.mxu0 0.0
    %631 = vmatpush1.msra.mxu0 %v557
    %632 = vmatprep.subr.mxu0 0.0
    %633 = vmatpush1.msra.mxu0 %v558
    %634 = vmatprep.subr.mxu0 0.0
    %635 = vmatpush1.msra.mxu0 %v559
    %636 = vmatprep.subr.mxu0 0.0
    %637 = vmatpush1.msra.mxu0 %v560
    %638 = vmatprep.subr.mxu0 0.0
    %639 = vmatpush1.msra.mxu0 %v561
    %640 = vmatprep.subr.mxu0 0.0
    %641 = vmatpush1.msra.mxu0 %v562
    %642 = vmatprep.subr.mxu0 0.0
    %643 = vmatpush1.msra.mxu0 %v563
    %644 = vmatprep.subr.mxu0 0.0
    %645 = vmatpush1.msra.mxu0 %v564
    %646 = vmatprep.subr.mxu0 0.0
    %647 = vmatpush1.msra.mxu0 %v565
    %648 = vmatprep.subr.mxu0 0.0
    %649 = vmatpush1.msra.mxu0 %v566
    %650 = vmatprep.subr.mxu0 0.0
    %651 = vmatpush1.msra.mxu0 %v567
    %652 = vmatprep.subr.mxu0 0.0
    %653 = vmatpush1.msra.mxu0 %v568
    %654 = vmatprep.subr.mxu0 0.0
    %655 = vmatpush1.msra.mxu0 %v569
    %656 = vmatprep.subr.mxu0 0.0
    %657 = vmatpush1.msra.mxu0 %v570
    %658 = vmatprep.subr.mxu0 0.0
    %659 = vmatpush1.msra.mxu0 %v571
    %660 = vmatprep.subr.mxu0 0.0
    %661 = vmatpush1.msra.mxu0 0.0
    %662 = vmatprep.subr.mxu0 0.0
    %663 = vmatpush1.msra.mxu0 0.0
    %664 = vmatprep.subr.mxu0 0.0
    %665 = vmatpush1.msra.mxu0 0.0
    %666 = vmatprep.subr.mxu0 0.0
    %667 = vmatpush1.msra.mxu0 0.0
    %668 = vmatprep.subr.mxu0 0.0
    %669 = vmatpush1.msra.mxu0 0.0
    %670 = vmatprep.subr.mxu0 0.0
    %671 = vmatpush1.msra.mxu0 0.0
    %672 = vmatprep.subr.mxu0 0.0
    %673 = vmatpush1.msra.mxu0 0.0
    %674 = vmatprep.subr.mxu0 0.0
    %675 = vmatpush1.msra.mxu0 0.0
    %676 = vmatprep.subr.mxu0 0.0
    %677 = vmatpush1.msra.mxu0 0.0
    %678 = vmatprep.subr.mxu0 0.0
    %679 = vmatpush1.msra.mxu0 0.0
    %680 = vmatprep.subr.mxu0 0.0
    %681 = vmatpush1.msra.mxu0 0.0
    %682 = vmatprep.subr.mxu0 0.0
    %683 = vmatpush1.msra.mxu0 0.0
    %684 = vmatprep.subr.mxu0 0.0
    %685 = vmatpush1.msra.mxu0 0.0
    %686 = vmatprep.subr.mxu0 0.0
    %687 = vmatpush1.msra.mxu0 0.0
    %688 = vmatprep.subr.mxu0 0.0
    %689 = vmatpush1.msra.mxu0 0.0
    %690 = vmatprep.subr.mxu0 0.0
    %691 = vmatpush1.msra.mxu0 0.0
    %692 = vmatprep.mubr.f32.mxu0 0.0
    %693 = vmatmul.mubr.f32.gmra.mrb[0].mxu0 %v572
    %v694 = vpop.f32.mrb[0].mxu0
    %v695 = vadd.f32 %v591, %v694
    %v696 = vpop.f32.mrb[0].mxu0
    %697 = vmatprep.mubr.f32.mxu0 0.0
    %698 = vmatmul.mubr.f32.gmra.mrb[0].mxu0 %v573
    %v699 = vpop.f32.mrb[0].mxu0
    %v700 = vadd.f32 %v596, %v699
    %v701 = vpop.f32.mrb[0].mxu0
    %702 = vmatprep.mubr.f32.mxu0 0.0
    %703 = vmatmul.mubr.f32.gmra.mrb[0].mxu0 %v574
    %v704 = vpop.f32.mrb[0].mxu0
    %v705 = vadd.f32 %v601, %v704
    %v706 = vpop.f32.mrb[0].mxu0
    %707 = vmatprep.mubr.f32.mxu0 0.0
    %708 = vmatmul.mubr.f32.gmra.mrb[0].mxu0 %v575
    %v709 = vpop.f32.mrb[0].mxu0
    %v710 = vadd.f32 %v606, %v709
    %v711 = vpop.f32.mrb[0].mxu0
    %712 = vmatprep.mubr.f32.mxu0 0.0
    %713 = vmatmul.mubr.f32.gmra.mrb[0].mxu0 %v576
    %v714 = vpop.f32.mrb[0].mxu0
    %v715 = vadd.f32 %v611, %v714
    %v716 = vpop.f32.mrb[0].mxu0
    %717 = vmatprep.mubr.f32.mxu0 0.0
    %718 = vmatmul.mubr.f32.gmra.mrb[0].mxu0 %v577
    %v719 = vpop.f32.mrb[0].mxu0
    %v720 = vadd.f32 %v616, %v719
    %v721 = vpop.f32.mrb[0].mxu0
    %722 = vmatprep.mubr.f32.mxu0 0.0
    %723 = vmatmul.mubr.f32.gmra.mrb[0].mxu0 %v578
    %v724 = vpop.f32.mrb[0].mxu0
    %v725 = vadd.f32 %v621, %v724
    %v726 = vpop.f32.mrb[0].mxu0
    %727 = vmatprep.mubr.f32.mxu0 0.0
    %728 = vmatmul.mubr.f32.gmra.mrb[0].mxu0 %v579
    %v729 = vpop.f32.mrb[0].mxu0
    %v730 = vadd.f32 %v626, %v729
    %v731 = vpop.f32.mrb[0].mxu0
    %732 = vdwg.mxu0
    %v733 = vmax.f32 %v695, 0.0
    %v734 = vmax.f32 %v700, 0.0
    %v735 = vmax.f32 %v705, 0.0
    %v736 = vmax.f32 %v710, 0.0
    %v737 = vmax.f32 %v715, 0.0
    %v738 = vmax.f32 %v720, 0.0
    %v739 = vmax.f32 %v725, 0.0
    %v740 = vmax.f32 %v730, 0.0
    %v741 = vld [vmem:[%s5] sm:$0xff]
    %v742 = vld [vmem:[%s5 + $0x8] sm:$0xff]
    %v743 = vld [vmem:[%s5 + $0x10] sm:$0xff]
    %v744 = vld [vmem:[%s5 + $0x18] sm:$0xff]
    %v745 = vld [vmem:[%s5 + $0x20] sm:$0xff]
    %v746 = vld [vmem:[%s5 + $0x28] sm:$0xff]
    %v747 = vld [vmem:[%s5 + $0x30] sm:$0xff]
    %v748 = vld [vmem:[%s5 + $0x38] sm:$0xff]
    %750 = vset.pattern.permute.xlu0 0
    %751 = vperm.xlu0 %750, %v741
    %v752 = vpop.permute.xlu0 %751
    %755 = vset.pattern.permute.xlu0 0
    %756 = vperm.xlu0 %755, %v742
    %v757 = vpop.permute.xlu0 %756
    %760 = vset.pattern.permute.xlu0 0
    %761 = vperm.xlu0 %760, %v743
    %v762 = vpop.permute.xlu0 %761
    %765 = vset.pattern.permute.xlu0 0
    %766 = vperm.xlu0 %765, %v744
    %v767 = vpop.permute.xlu0 %766
    %770 = vset.pattern.permute.xlu0 0
    %771 = vperm.xlu0 %770, %v745
    %v772 = vpop.permute.xlu0 %771
    %775 = vset.pattern.permute.xlu0 0
    %776 = vperm.xlu0 %775, %v746
    %v777 = vpop.permute.xlu0 %776
    %780 = vset.pattern.permute.xlu0 0
    %781 = vperm.xlu0 %780, %v747
    %v782 = vpop.permute.xlu0 %781
    %785 = vset.pattern.permute.xlu0 0
    %786 = vperm.xlu0 %785, %v748
    %v787 = vpop.permute.xlu0 %786
    %v789 = vmul.f32 %v752, %v733
    %v790 = vmul.f32 %v757, %v734
    %v791 = vmul.f32 %v762, %v735
    %v792 = vmul.f32 %v767, %v736
    %v793 = vmul.f32 %v772, %v737
    %v794 = vmul.f32 %v777, %v738
    %v795 = vmul.f32 %v782, %v739
    %v796 = vmul.f32 %v787, %v740
    %v797 = vadd.f32 %v789, %v790
    %v798 = vadd.f32 %v797, %v791
    %v799 = vadd.f32 %v798, %v792
    %v800 = vadd.f32 %v799, %v793
    %v801 = vadd.f32 %v800, %v794
    %v802 = vadd.f32 %v801, %v795
    %v803 = vadd.f32 %v802, %v796
    %v804 = vrot.slane %v803, 4
    %v805 = vadd.f32 %v803, %v804
    %v806 = vrot.slane %v805, 2
    %v807 = vadd.f32 %v805, %v806
    %v808 = vrot.slane %v807, 1
    %v809 = vadd.f32 %v807, %v808
    %810 = vset.pattern.permute.xlu0 1
    %811 = vperm.xlu0 %810, %v741
    %v812 = vpop.permute.xlu0 %811
    %814 = vset.pattern.permute.xlu0 1
    %815 = vperm.xlu0 %814, %v742
    %v816 = vpop.permute.xlu0 %815
    %818 = vset.pattern.permute.xlu0 1
    %819 = vperm.xlu0 %818, %v743
    %v820 = vpop.permute.xlu0 %819
    %822 = vset.pattern.permute.xlu0 1
    %823 = vperm.xlu0 %822, %v744
    %v824 = vpop.permute.xlu0 %823
    %826 = vset.pattern.permute.xlu0 1
    %827 = vperm.xlu0 %826, %v745
    %v828 = vpop.permute.xlu0 %827
    %830 = vset.pattern.permute.xlu0 1
    %831 = vperm.xlu0 %830, %v746
    %v832 = vpop.permute.xlu0 %831
    %834 = vset.pattern.permute.xlu0 1
    %835 = vperm.xlu0 %834, %v747
    %v836 = vpop.permute.xlu0 %835
    %838 = vset.pattern.permute.xlu0 1
    %839 = vperm.xlu0 %838, %v748
    %v840 = vpop.permute.xlu0 %839
    %v842 = vmul.f32 %v812, %v733
    %v843 = vmul.f32 %v816, %v734
    %v844 = vmul.f32 %v820, %v735
    %v845 = vmul.f32 %v824, %v736
    %v846 = vmul.f32 %v828, %v737
    %v847 = vmul.f32 %v832, %v738
    %v848 = vmul.f32 %v836, %v739
    %v849 = vmul.f32 %v840, %v740
    %v850 = vadd.f32 %v842, %v843
    %v851 = vadd.f32 %v850, %v844
    %v852 = vadd.f32 %v851, %v845
    %v853 = vadd.f32 %v852, %v846
    %v854 = vadd.f32 %v853, %v847
    %v855 = vadd.f32 %v854, %v848
    %v856 = vadd.f32 %v855, %v849
    %v857 = vrot.slane %v856, 4
    %v858 = vadd.f32 %v856, %v857
    %v859 = vrot.slane %v858, 2
    %v860 = vadd.f32 %v858, %v859
    %v861 = vrot.slane %v860, 1
    %v862 = vadd.f32 %v860, %v861
    %vm863 = vcmask 1040384
    %v864 = vsel %vm863, %v809, %v862
    %v865 = vld [vmem:[%s6] sm:$0x3]
    %867 = vset.pattern.permute.xlu0 0
    %868 = vperm.xlu0 %867, %v865
    %v869 = vpop.permute.xlu0 %868
    %v871 = vadd.f32 %v864, %v869
    %v872 = vmax.f32 %v871, 0.0
    %873 = vst [vmem:[#allocation2] sm:$0x3] %v872
    // Predicated region
    $region30: #{tpu_custom_call.1} parent=1 // pred_check
      _
    $region31: #{tpu_custom_call.1} parent=1 // pred_check_branch
      %875 = sbr.rel (0) target = $region33
    $region32: #{tpu_custom_call.1} parent=1 // pred_region
      %s877 = ssub.s32 32, 32
      %878 = vsyncadd [#allocation3], %s877
      %s880 = sshll.u32 [#allocation2], 4
      %s881 = int_to_ptr.vmem [resolvable:$true] %s880
      %883 = dma.vmem_to_hbm [thread:$0]  %s881, 32, %s7, [#allocation3]
    $region33: #{tpu_custom_call.1} parent=1 // pred_fallthru
      _
    // Predicated region
    $region34: #{tpu_custom_call.1} parent=1 // pred_check
      _
    $region35: #{tpu_custom_call.1} parent=1 // pred_check_branch
      %885 = sbr.rel (0) target = $region37
    $region36: #{tpu_custom_call.1} parent=1 // pred_region
      %886 = dma.done [#allocation3], 32
    $region37: #{tpu_custom_call.1} parent=1 // pred_fallthru
      _
    %887 = vsyncpa [#allocation3], 1

</llo_original>
